<compile_context>
chip_gen: v5e
topology: v5e:2x2
jax: 0.10.0
libtpu: 0.0.40
codegen_flags: <defaults>
</compile_context>

<pallas_src>
import functools
import math

import jax
import jax.numpy as jnp
from jax import lax
from jax.experimental import pallas as pl
from jax.experimental.pallas import tpu as pltpu


def _mha_kernel(x_ref, wqkv_ref, bqkv_ref, wo_ref, bo_ref, o_ref, *, num_heads):
    # x block: (BB, S, E); wqkv: (E, 3E); bqkv: (1, 3E); wo: (H, D, E);
    # bo: (1, E); out block: (BB, S, E)
    BB, S, E = x_ref.shape
    H = num_heads
    D = E // H
    M = BB * S

    # Fused QKV projection: one (M, E) @ (E, 3E) MXU matmul (bf16 in, f32 acc).
    x = x_ref[...].reshape(M, E).astype(jnp.bfloat16)
    qkv = jnp.dot(x, wqkv_ref[...], preferred_element_type=jnp.float32) + bqkv_ref[0]

    # 1/sqrt(D) is already folded into Wq/bq by the wrapper.
    q = qkv[:, :E].astype(jnp.bfloat16)
    k = qkv[:, E:2 * E].astype(jnp.bfloat16)
    v = qkv[:, 2 * E:].astype(jnp.bfloat16)

    # q @ k.T expressed via dimension_numbers (contract last dims) — no .T emitted.
    dn_qkt = (((1,), (1,)), ((), ()))

    # Output bias broadcast hoisted out of the loops.
    bias_o = jnp.broadcast_to(bo_ref[0], (S, E)).astype(jnp.float32)

    for b in range(BB):                      # static; BB is small
        r0 = b * S
        acc = bias_o                         # (S, E) f32 accumulator
        for h in range(H):                   # static; accumulate, never concatenate
            c0 = h * D
            qh = q[r0:r0 + S, c0:c0 + D]
            kh = k[r0:r0 + S, c0:c0 + D]
            vh = v[r0:r0 + S, c0:c0 + D]

            s = lax.dot_general(qh, kh, dn_qkt, preferred_element_type=jnp.float32)
            s = s - jnp.max(s, axis=-1, keepdims=True)
            p = jnp.exp(s)
            attn = p * pl.reciprocal(jnp.sum(p, axis=-1, keepdims=True), approx=True)

            ctx = jnp.dot(attn.astype(jnp.bfloat16), vh,
                          preferred_element_type=jnp.float32)          # (S, D)
            # out += ctx_h @ Wo.T[h*D:(h+1)*D, :]
            acc = acc + jnp.dot(ctx.astype(jnp.bfloat16), wo_ref[h],
                                preferred_element_type=jnp.float32)
        o_ref[b] = acc.astype(o_ref.dtype)


def _pick_batch_block(B):
    """Largest divisor of B that still leaves >=2 grid steps (v7x: 2 TCs/chip)
    and keeps the per-step block modest."""
    best = 1
    for bb in range(1, B + 1):
        if B % bb == 0 and B // bb >= 2 and bb <= 8:
            best = bb
    return best


def multi_head_attention(x, params, *, num_heads, batch_block=None):
    """x: (B, S, E) float32.  params: dict of weights/biases (PyTorch layout)."""
    B, S, E = x.shape
    assert E % num_heads == 0
    D = E // num_heads
    inv_scale = 1.0 / math.sqrt(D)

    # --- host-side weight prep (free layout plumbing) ----------------------
    wqkv_t = jnp.concatenate(
        [params["wq"].T * inv_scale, params["wk"].T, params["wv"].T],
        axis=1).astype(jnp.bfloat16)                                     # (E, 3E)
    bqkv = jnp.concatenate(
        [params["bq"] * inv_scale, params["bk"], params["bv"]]
    ).reshape(1, 3 * E).astype(jnp.float32)                              # (1, 3E)
    wo3 = params["wo"].T.reshape(num_heads, D, E).astype(jnp.bfloat16)   # (H, D, E)
    bo2 = params["bo"].reshape(1, E).astype(jnp.float32)                 # (1, E)

    bb = batch_block if batch_block is not None else _pick_batch_block(B)
    assert B % bb == 0

    kernel = functools.partial(_mha_kernel, num_heads=num_heads)
    x_spec = pl.BlockSpec((bb, S, E), lambda i: (i, 0, 0))

    return pl.pallas_call(
        kernel,
        out_shape=jax.ShapeDtypeStruct((B, S, E), x.dtype),
        grid_spec=pltpu.PrefetchScalarGridSpec(
            num_scalar_prefetch=0,
            grid=(B // bb,),
            in_specs=[
                x_spec,
                pl.BlockSpec((E, 3 * E), lambda i: (0, 0)),
                pl.BlockSpec((1, 3 * E), lambda i: (0, 0)),
                pl.BlockSpec((num_heads, D, E), lambda i: (0, 0, 0)),
                pl.BlockSpec((1, E), lambda i: (0, 0)),
            ],
            out_specs=x_spec,
        ),
        compiler_params=pltpu.CompilerParams(
            dimension_semantics=("parallel",)),
    )(x, wqkv_t, bqkv, wo3, bo2)


def _reference(x, params, *, num_heads):
    """Pure-JAX f32 reference mirroring the PyTorch forward (eval mode)."""
    B, S, E = x.shape
    D = E // num_heads
    scale = math.sqrt(D)

    def lin(v, w, b):
        return jnp.einsum("bse,oe->bso", v, w) + b

    q = lin(x, params["wq"], params["bq"]).reshape(B, S, num_heads, D).transpose(0, 2, 1, 3)
    k = lin(x, params["wk"], params["bk"]).reshape(B, S, num_heads, D).transpose(0, 2, 1, 3)
    v = lin(x, params["wv"], params["bv"]).reshape(B, S, num_heads, D).transpose(0, 2, 1, 3)

    scores = jnp.einsum("bhqd,bhkd->bhqk", q, k) / scale
    attn = jax.nn.softmax(scores, axis=-1)
    out = jnp.einsum("bhqk,bhkd->bhqd", attn, v)
    out = out.transpose(0, 2, 1, 3).reshape(B, S, E)
    return lin(out, params["wo"], params["bo"])


def _init_params(key, embed_dim):
    """Deterministic init mimicking nn.Linear's U(-1/sqrt(in), 1/sqrt(in))."""
    bound = 1.0 / math.sqrt(embed_dim)
    keys = jax.random.split(key, 8)
    names = ["wq", "bq", "wk", "bk", "wv", "bv", "wo", "bo"]
    params = {}
    for i, name in enumerate(names):
        shape = (embed_dim, embed_dim) if name.startswith("w") else (embed_dim,)
        params[name] = jax.random.uniform(
            keys[i], shape, jnp.float32, minval=-bound, maxval=bound)
    return params


if __name__ == "__main__":
    # E=128 keeps the lane dimension dense (no masked partial stores) while
    # staying small; S=8 is exactly one f32 vreg of sublanes.
    B, S, E, H = 2, 8, 128, 4

    key = jax.random.PRNGKey(0)
    kx, kp = jax.random.split(key)
    x = jax.random.normal(kx, (B, S, E), dtype=jnp.float32)
    params = _init_params(kp, E)

    out = multi_head_attention(x, params, num_heads=H)
    out = jax.block_until_ready(out)

    ref = _reference(x, params, num_heads=H)
    assert out.shape == (B, S, E)
    max_err = float(jnp.max(jnp.abs(out - ref)))
    # bf16 MXU matmuls + approx reciprocal -> looser tolerance vs f32 reference.
    assert jnp.allclose(out, ref, atol=2e-2, rtol=2e-2), f"mismatch vs reference (max |err|={max_err})"

    print("KERNEL_OK")
</pallas_src>

<mosaic_0001>
module attributes {stable_mosaic.version = 11 : i64} {
  func.func @_mha_kernel(%arg0: i32, %arg1: memref<1x8x128xf32, #tpu.memory_space<vmem>>, %arg2: memref<128x384xbf16, #tpu.memory_space<vmem>>, %arg3: memref<1x384xf32, #tpu.memory_space<vmem>>, %arg4: memref<4x32x128xbf16, #tpu.memory_space<vmem>>, %arg5: memref<1x128xf32, #tpu.memory_space<vmem>>, %arg6: memref<1x8x128xf32, #tpu.memory_space<vmem>>) attributes {dimension_semantics = [#tpu.dimension_semantics<parallel>], iteration_bounds = array<i64: 2>, scalar_prefetch = 0 : i64, scratch_operands = 0 : i64, tpu.core_type = #tpu.core_type<tc>, window_params = [{transform_indices = @transform_0, window_bounds = array<i64: 1, 8, 128>}, {pipeline_mode = #tpu.pipeline_mode<synchronous>, transform_indices = @transform_1, window_bounds = array<i64: 128, 384>}, {pipeline_mode = #tpu.pipeline_mode<synchronous>, transform_indices = @transform_2, window_bounds = array<i64: 1, 384>}, {pipeline_mode = #tpu.pipeline_mode<synchronous>, transform_indices = @transform_3, window_bounds = array<i64: 4, 32, 128>}, {pipeline_mode = #tpu.pipeline_mode<synchronous>, transform_indices = @transform_4, window_bounds = array<i64: 1, 128>}, {transform_indices = @transform_5, window_bounds = array<i64: 1, 8, 128>}]} {
    %c0 = arith.constant 0 : index
    %c0_0 = arith.constant 0 : index
    %c0_1 = arith.constant 0 : index
    %0 = vector.load %arg1[%c0, %c0_0, %c0_1] : memref<1x8x128xf32, #tpu.memory_space<vmem>>, vector<1x8x128xf32>
    %1 = vector.shape_cast %0 : vector<1x8x128xf32> to vector<8x128xf32>
    %2 = arith.truncf %1 : vector<8x128xf32> to vector<8x128xbf16>
    %c0_2 = arith.constant 0 : index
    %c0_3 = arith.constant 0 : index
    %3 = vector.load %arg2[%c0_2, %c0_3] : memref<128x384xbf16, #tpu.memory_space<vmem>>, vector<128x384xbf16>
    %cst = arith.constant dense<0.000000e+00> : vector<8x384xf32>
    %4 = tpu.matmul %2, %3, %cst {dimension_numbers = #tpu.dot_dimension_numbers<[1], [0], [0], [1], [0, 0, 1, 1], [], []>} : vector<8x128xbf16>, vector<128x384xbf16>, vector<8x384xf32> -> vector<8x384xf32>
    %c0_4 = arith.constant 0 : index
    %c0_5 = arith.constant 0 : index
    %5 = vector.load %arg3[%c0_4, %c0_5] : memref<1x384xf32, #tpu.memory_space<vmem>>, vector<1x384xf32>
    %6 = vector.shape_cast %5 : vector<1x384xf32> to vector<384xf32>
    %7 = vector.shape_cast %6 : vector<384xf32> to vector<1x384xf32>
    %8 = vector.broadcast %7 : vector<1x384xf32> to vector<8x384xf32>
    %9 = arith.addf %4, %8 : vector<8x384xf32>
    %10 = vector.extract_strided_slice %9 {offsets = [0, 0], sizes = [8, 128], strides = [1, 1]} : vector<8x384xf32> to vector<8x128xf32>
    %11 = arith.truncf %10 : vector<8x128xf32> to vector<8x128xbf16>
    %12 = vector.extract_strided_slice %9 {offsets = [0, 128], sizes = [8, 128], strides = [1, 1]} : vector<8x384xf32> to vector<8x128xf32>
    %13 = arith.truncf %12 : vector<8x128xf32> to vector<8x128xbf16>
    %14 = vector.extract_strided_slice %9 {offsets = [0, 256], sizes = [8, 128], strides = [1, 1]} : vector<8x384xf32> to vector<8x128xf32>
    %15 = arith.truncf %14 : vector<8x128xf32> to vector<8x128xbf16>
    %c0_6 = arith.constant 0 : index
    %c0_7 = arith.constant 0 : index
    %16 = vector.load %arg5[%c0_6, %c0_7] : memref<1x128xf32, #tpu.memory_space<vmem>>, vector<1x128xf32>
    %17 = vector.shape_cast %16 : vector<1x128xf32> to vector<128xf32>
    %18 = vector.shape_cast %17 : vector<128xf32> to vector<1x128xf32>
    %19 = vector.broadcast %18 : vector<1x128xf32> to vector<8x128xf32>
    %20 = vector.extract_strided_slice %11 {offsets = [0, 0], sizes = [8, 32], strides = [1, 1]} : vector<8x128xbf16> to vector<8x32xbf16>
    %21 = vector.extract_strided_slice %13 {offsets = [0, 0], sizes = [8, 32], strides = [1, 1]} : vector<8x128xbf16> to vector<8x32xbf16>
    %22 = vector.extract_strided_slice %15 {offsets = [0, 0], sizes = [8, 32], strides = [1, 1]} : vector<8x128xbf16> to vector<8x32xbf16>
    %cst_8 = arith.constant dense<0.000000e+00> : vector<8x8xf32>
    %23 = tpu.matmul %20, %21, %cst_8 {dimension_numbers = #tpu.dot_dimension_numbers<[1], [1], [0], [0], [0, 0, 1, 0], [], []>} : vector<8x32xbf16>, vector<8x32xbf16>, vector<8x8xf32> -> vector<8x8xf32>
    %cst_9 = arith.constant dense<0xFF800000> : vector<8xf32>
    %24 = vector.multi_reduction <maximumf>, %23, %cst_9 [1] : vector<8x8xf32> to vector<8xf32>
    %25 = vector.shape_cast %24 : vector<8xf32> to vector<8x1xf32>
    %26 = vector.broadcast %25 : vector<8x1xf32> to vector<8x8xf32>
    %27 = arith.subf %23, %26 : vector<8x8xf32>
    %28 = math.exp %27 : vector<8x8xf32>
    %cst_10 = arith.constant dense<0.000000e+00> : vector<8xf32>
    %29 = vector.multi_reduction <add>, %28, %cst_10 [1] : vector<8x8xf32> to vector<8xf32>
    %30 = vector.shape_cast %29 : vector<8xf32> to vector<8x1xf32>
    %31 = tpu.reciprocal %30 {approx = true} : vector<8x1xf32> -> vector<8x1xf32>
    %32 = vector.broadcast %31 : vector<8x1xf32> to vector<8x8xf32>
    %33 = arith.mulf %28, %32 : vector<8x8xf32>
    %34 = arith.truncf %33 : vector<8x8xf32> to vector<8x8xbf16>
    %cst_11 = arith.constant dense<0.000000e+00> : vector<8x32xf32>
    %35 = tpu.matmul %34, %22, %cst_11 {dimension_numbers = #tpu.dot_dimension_numbers<[1], [0], [0], [1], [0, 0, 1, 1], [], []>} : vector<8x8xbf16>, vector<8x32xbf16>, vector<8x32xf32> -> vector<8x32xf32>
    %36 = arith.truncf %35 : vector<8x32xf32> to vector<8x32xbf16>
    %c0_12 = arith.constant 0 : index
    %c0_13 = arith.constant 0 : index
    %c0_14 = arith.constant 0 : index
    %37 = vector.load %arg4[%c0_12, %c0_13, %c0_14] : memref<4x32x128xbf16, #tpu.memory_space<vmem>>, vector<1x32x128xbf16>
    %38 = vector.shape_cast %37 : vector<1x32x128xbf16> to vector<32x128xbf16>
    %cst_15 = arith.constant dense<0.000000e+00> : vector<8x128xf32>
    %39 = tpu.matmul %36, %38, %cst_15 {dimension_numbers = #tpu.dot_dimension_numbers<[1], [0], [0], [1], [0, 0, 1, 1], [], []>} : vector<8x32xbf16>, vector<32x128xbf16>, vector<8x128xf32> -> vector<8x128xf32>
    %40 = arith.addf %19, %39 : vector<8x128xf32>
    %41 = vector.extract_strided_slice %11 {offsets = [0, 32], sizes = [8, 32], strides = [1, 1]} : vector<8x128xbf16> to vector<8x32xbf16>
    %42 = vector.extract_strided_slice %13 {offsets = [0, 32], sizes = [8, 32], strides = [1, 1]} : vector<8x128xbf16> to vector<8x32xbf16>
    %43 = vector.extract_strided_slice %15 {offsets = [0, 32], sizes = [8, 32], strides = [1, 1]} : vector<8x128xbf16> to vector<8x32xbf16>
    %cst_16 = arith.constant dense<0.000000e+00> : vector<8x8xf32>
    %44 = tpu.matmul %41, %42, %cst_16 {dimension_numbers = #tpu.dot_dimension_numbers<[1], [1], [0], [0], [0, 0, 1, 0], [], []>} : vector<8x32xbf16>, vector<8x32xbf16>, vector<8x8xf32> -> vector<8x8xf32>
    %cst_17 = arith.constant dense<0xFF800000> : vector<8xf32>
    %45 = vector.multi_reduction <maximumf>, %44, %cst_17 [1] : vector<8x8xf32> to vector<8xf32>
    %46 = vector.shape_cast %45 : vector<8xf32> to vector<8x1xf32>
    %47 = vector.broadcast %46 : vector<8x1xf32> to vector<8x8xf32>
    %48 = arith.subf %44, %47 : vector<8x8xf32>
    %49 = math.exp %48 : vector<8x8xf32>
    %cst_18 = arith.constant dense<0.000000e+00> : vector<8xf32>
    %50 = vector.multi_reduction <add>, %49, %cst_18 [1] : vector<8x8xf32> to vector<8xf32>
    %51 = vector.shape_cast %50 : vector<8xf32> to vector<8x1xf32>
    %52 = tpu.reciprocal %51 {approx = true} : vector<8x1xf32> -> vector<8x1xf32>
    %53 = vector.broadcast %52 : vector<8x1xf32> to vector<8x8xf32>
    %54 = arith.mulf %49, %53 : vector<8x8xf32>
    %55 = arith.truncf %54 : vector<8x8xf32> to vector<8x8xbf16>
    %cst_19 = arith.constant dense<0.000000e+00> : vector<8x32xf32>
    %56 = tpu.matmul %55, %43, %cst_19 {dimension_numbers = #tpu.dot_dimension_numbers<[1], [0], [0], [1], [0, 0, 1, 1], [], []>} : vector<8x8xbf16>, vector<8x32xbf16>, vector<8x32xf32> -> vector<8x32xf32>
    %57 = arith.truncf %56 : vector<8x32xf32> to vector<8x32xbf16>
    %c1 = arith.constant 1 : index
    %c0_20 = arith.constant 0 : index
    %c0_21 = arith.constant 0 : index
    %58 = vector.load %arg4[%c1, %c0_20, %c0_21] : memref<4x32x128xbf16, #tpu.memory_space<vmem>>, vector<1x32x128xbf16>
    %59 = vector.shape_cast %58 : vector<1x32x128xbf16> to vector<32x128xbf16>
    %cst_22 = arith.constant dense<0.000000e+00> : vector<8x128xf32>
    %60 = tpu.matmul %57, %59, %cst_22 {dimension_numbers = #tpu.dot_dimension_numbers<[1], [0], [0], [1], [0, 0, 1, 1], [], []>} : vector<8x32xbf16>, vector<32x128xbf16>, vector<8x128xf32> -> vector<8x128xf32>
    %61 = arith.addf %40, %60 : vector<8x128xf32>
    %62 = vector.extract_strided_slice %11 {offsets = [0, 64], sizes = [8, 32], strides = [1, 1]} : vector<8x128xbf16> to vector<8x32xbf16>
    %63 = vector.extract_strided_slice %13 {offsets = [0, 64], sizes = [8, 32], strides = [1, 1]} : vector<8x128xbf16> to vector<8x32xbf16>
    %64 = vector.extract_strided_slice %15 {offsets = [0, 64], sizes = [8, 32], strides = [1, 1]} : vector<8x128xbf16> to vector<8x32xbf16>
    %cst_23 = arith.constant dense<0.000000e+00> : vector<8x8xf32>
    %65 = tpu.matmul %62, %63, %cst_23 {dimension_numbers = #tpu.dot_dimension_numbers<[1], [1], [0], [0], [0, 0, 1, 0], [], []>} : vector<8x32xbf16>, vector<8x32xbf16>, vector<8x8xf32> -> vector<8x8xf32>
    %cst_24 = arith.constant dense<0xFF800000> : vector<8xf32>
    %66 = vector.multi_reduction <maximumf>, %65, %cst_24 [1] : vector<8x8xf32> to vector<8xf32>
    %67 = vector.shape_cast %66 : vector<8xf32> to vector<8x1xf32>
    %68 = vector.broadcast %67 : vector<8x1xf32> to vector<8x8xf32>
    %69 = arith.subf %65, %68 : vector<8x8xf32>
    %70 = math.exp %69 : vector<8x8xf32>
    %cst_25 = arith.constant dense<0.000000e+00> : vector<8xf32>
    %71 = vector.multi_reduction <add>, %70, %cst_25 [1] : vector<8x8xf32> to vector<8xf32>
    %72 = vector.shape_cast %71 : vector<8xf32> to vector<8x1xf32>
    %73 = tpu.reciprocal %72 {approx = true} : vector<8x1xf32> -> vector<8x1xf32>
    %74 = vector.broadcast %73 : vector<8x1xf32> to vector<8x8xf32>
    %75 = arith.mulf %70, %74 : vector<8x8xf32>
    %76 = arith.truncf %75 : vector<8x8xf32> to vector<8x8xbf16>
    %cst_26 = arith.constant dense<0.000000e+00> : vector<8x32xf32>
    %77 = tpu.matmul %76, %64, %cst_26 {dimension_numbers = #tpu.dot_dimension_numbers<[1], [0], [0], [1], [0, 0, 1, 1], [], []>} : vector<8x8xbf16>, vector<8x32xbf16>, vector<8x32xf32> -> vector<8x32xf32>
    %78 = arith.truncf %77 : vector<8x32xf32> to vector<8x32xbf16>
    %c2 = arith.constant 2 : index
    %c0_27 = arith.constant 0 : index
    %c0_28 = arith.constant 0 : index
    %79 = vector.load %arg4[%c2, %c0_27, %c0_28] : memref<4x32x128xbf16, #tpu.memory_space<vmem>>, vector<1x32x128xbf16>
    %80 = vector.shape_cast %79 : vector<1x32x128xbf16> to vector<32x128xbf16>
    %cst_29 = arith.constant dense<0.000000e+00> : vector<8x128xf32>
    %81 = tpu.matmul %78, %80, %cst_29 {dimension_numbers = #tpu.dot_dimension_numbers<[1], [0], [0], [1], [0, 0, 1, 1], [], []>} : vector<8x32xbf16>, vector<32x128xbf16>, vector<8x128xf32> -> vector<8x128xf32>
    %82 = arith.addf %61, %81 : vector<8x128xf32>
    %83 = vector.extract_strided_slice %11 {offsets = [0, 96], sizes = [8, 32], strides = [1, 1]} : vector<8x128xbf16> to vector<8x32xbf16>
    %84 = vector.extract_strided_slice %13 {offsets = [0, 96], sizes = [8, 32], strides = [1, 1]} : vector<8x128xbf16> to vector<8x32xbf16>
    %85 = vector.extract_strided_slice %15 {offsets = [0, 96], sizes = [8, 32], strides = [1, 1]} : vector<8x128xbf16> to vector<8x32xbf16>
    %cst_30 = arith.constant dense<0.000000e+00> : vector<8x8xf32>
    %86 = tpu.matmul %83, %84, %cst_30 {dimension_numbers = #tpu.dot_dimension_numbers<[1], [1], [0], [0], [0, 0, 1, 0], [], []>} : vector<8x32xbf16>, vector<8x32xbf16>, vector<8x8xf32> -> vector<8x8xf32>
    %cst_31 = arith.constant dense<0xFF800000> : vector<8xf32>
    %87 = vector.multi_reduction <maximumf>, %86, %cst_31 [1] : vector<8x8xf32> to vector<8xf32>
    %88 = vector.shape_cast %87 : vector<8xf32> to vector<8x1xf32>
    %89 = vector.broadcast %88 : vector<8x1xf32> to vector<8x8xf32>
    %90 = arith.subf %86, %89 : vector<8x8xf32>
    %91 = math.exp %90 : vector<8x8xf32>
    %cst_32 = arith.constant dense<0.000000e+00> : vector<8xf32>
    %92 = vector.multi_reduction <add>, %91, %cst_32 [1] : vector<8x8xf32> to vector<8xf32>
    %93 = vector.shape_cast %92 : vector<8xf32> to vector<8x1xf32>
    %94 = tpu.reciprocal %93 {approx = true} : vector<8x1xf32> -> vector<8x1xf32>
    %95 = vector.broadcast %94 : vector<8x1xf32> to vector<8x8xf32>
    %96 = arith.mulf %91, %95 : vector<8x8xf32>
    %97 = arith.truncf %96 : vector<8x8xf32> to vector<8x8xbf16>
    %cst_33 = arith.constant dense<0.000000e+00> : vector<8x32xf32>
    %98 = tpu.matmul %97, %85, %cst_33 {dimension_numbers = #tpu.dot_dimension_numbers<[1], [0], [0], [1], [0, 0, 1, 1], [], []>} : vector<8x8xbf16>, vector<8x32xbf16>, vector<8x32xf32> -> vector<8x32xf32>
    %99 = arith.truncf %98 : vector<8x32xf32> to vector<8x32xbf16>
    %c3 = arith.constant 3 : index
    %c0_34 = arith.constant 0 : index
    %c0_35 = arith.constant 0 : index
    %100 = vector.load %arg4[%c3, %c0_34, %c0_35] : memref<4x32x128xbf16, #tpu.memory_space<vmem>>, vector<1x32x128xbf16>
    %101 = vector.shape_cast %100 : vector<1x32x128xbf16> to vector<32x128xbf16>
    %cst_36 = arith.constant dense<0.000000e+00> : vector<8x128xf32>
    %102 = tpu.matmul %99, %101, %cst_36 {dimension_numbers = #tpu.dot_dimension_numbers<[1], [0], [0], [1], [0, 0, 1, 1], [], []>} : vector<8x32xbf16>, vector<32x128xbf16>, vector<8x128xf32> -> vector<8x128xf32>
    %103 = arith.addf %82, %102 : vector<8x128xf32>
    %c0_37 = arith.constant 0 : index
    %c0_38 = arith.constant 0 : index
    %c0_39 = arith.constant 0 : index
    %104 = vector.load %arg6[%c0_37, %c0_38, %c0_39] : memref<1x8x128xf32, #tpu.memory_space<vmem>>, vector<1x8x128xf32>
    %105 = vector.shape_cast %104 : vector<1x8x128xf32> to vector<8x128xf32>
    %106 = vector.shape_cast %103 : vector<8x128xf32> to vector<1x8x128xf32>
    tpu.vector_store %arg6[%c0_37, %c0_38, %c0_39], %106 {strides = array<i32>} : memref<1x8x128xf32, #tpu.memory_space<vmem>>, vector<1x8x128xf32>,
    return
  }
  func.func @transform_0(%arg0: i32) -> (i32, i32, i32) {
    %c0_i32 = arith.constant 0 : i32
    %c0_i32_0 = arith.constant 0 : i32
    %c0_i32_1 = arith.constant 0 : i32
    return %arg0, %c0_i32, %c0_i32_0 : i32, i32, i32
  }
  func.func @transform_1(%arg0: i32) -> (i32, i32) {
    %c0_i32 = arith.constant 0 : i32
    %c0_i32_0 = arith.constant 0 : i32
    %c0_i32_1 = arith.constant 0 : i32
    return %c0_i32, %c0_i32_0 : i32, i32
  }
  func.func @transform_2(%arg0: i32) -> (i32, i32) {
    %c0_i32 = arith.constant 0 : i32
    %c0_i32_0 = arith.constant 0 : i32
    %c0_i32_1 = arith.constant 0 : i32
    return %c0_i32, %c0_i32_0 : i32, i32
  }
  func.func @transform_3(%arg0: i32) -> (i32, i32, i32) {
    %c0_i32 = arith.constant 0 : i32
    %c0_i32_0 = arith.constant 0 : i32
    %c0_i32_1 = arith.constant 0 : i32
    %c0_i32_2 = arith.constant 0 : i32
    return %c0_i32, %c0_i32_0, %c0_i32_1 : i32, i32, i32
  }
  func.func @transform_4(%arg0: i32) -> (i32, i32) {
    %c0_i32 = arith.constant 0 : i32
    %c0_i32_0 = arith.constant 0 : i32
    %c0_i32_1 = arith.constant 0 : i32
    return %c0_i32, %c0_i32_0 : i32, i32
  }
  func.func @transform_5(%arg0: i32) -> (i32, i32, i32) {
    %c0_i32 = arith.constant 0 : i32
    %c0_i32_0 = arith.constant 0 : i32
    %c0_i32_1 = arith.constant 0 : i32
    return %arg0, %c0_i32, %c0_i32_0 : i32, i32, i32
  }
}

</mosaic_0001>

<llo_original>
// kernel: tpu_custom_call.1
$region0: #{tpu_custom_call.1}
  #allocation0 [shape = 'u32[]', space=smem, size = 0x4, offset = 0x4, fixed_abs, tag = 'smem constant byte address 0x4 - core index']
  #allocation1 [shape = 'u32[72,128]{1,0:T(1,128)}', space=vmem, size = 0x9000, scoped, tag = 'internal scratch']
  %s0 = inlined_call_operand.hbm [shape: f32[2,8,128], index: 0, kind: input, shape index: {}]
  %s1 = inlined_call_operand.hbm [shape: bf16[128,384], index: 1, kind: input, shape index: {}]
  %s2 = inlined_call_operand.hbm [shape: f32[1,384], index: 2, kind: input, shape index: {}]
  %s3 = inlined_call_operand.hbm [shape: bf16[4,32,128], index: 3, kind: input, shape index: {}]
  %s4 = inlined_call_operand.vmem [shape: f32[1,128], index: 4, kind: input, shape index: {}]
  %s5 = inlined_call_operand.hbm [shape: f32[2,8,128], index: 5, kind: output, shape index: {}]
  %s6 = sld [smem:[#allocation0]]
  $region69: #{tpu_custom_call.1} parent=0
    _
  %s8 = ssub.s32 1, %s6
  %s9 = scalar_select 0, %s8, %s6
  $region1: #{tpu_custom_call.1} parent=0
    #allocation2 [shape = 'u8[8192]{0}', space=vmem, size = 0x2000, scoped, tag = 'input window, operand 0']
    #allocation3 [shape = 's32[2]{0}', space=sflag, size = 0x8, scoped, tag = 'scoped memory for tpu_custom_call.1']
    #allocation4 [shape = 's32[2]{0}', space=sflag, size = 0x8, scoped, tag = 'scoped memory for tpu_custom_call.1']
    #allocation5 [shape = 'u8[98304]{0}', space=vmem, size = 0x18000, scoped, tag = 'input window, operand 1, single buffered']
    #allocation6 [shape = 's32[1]{0}', space=sflag, size = 0x4, scoped, tag = 'scoped memory for tpu_custom_call.1']
    #allocation7 [shape = 'u8[1536]{0}', space=vmem, size = 0x800, scoped, tag = 'input window, operand 2, single buffered']
    #allocation8 [shape = 'u8[32768]{0}', space=vmem, size = 0x8000, scoped, tag = 'input window, operand 3, single buffered']
    #allocation9 [shape = 's32[1]{0}', space=sflag, size = 0x4, scoped, tag = 'scoped memory for tpu_custom_call.1']
    #allocation10 [shape = 'u8[8192]{0}', space=vmem, size = 0x2000, scoped, tag = 'output window, operand 0']
    %10 = vsyncpa [#allocation3], 0
    %s11 = scalar_lea.sflag [#allocation3], 1
    %12 = vsyncpa %s11, 0
    %13 = vsyncpa [#allocation6], 0
    %14 = vsyncpa [#allocation9], 0
    %15 = vsyncpa [#allocation4], 0
    %s16 = scalar_lea.sflag [#allocation4], 1
    %17 = vsyncpa %s16, 0
    loop: start=0, step=1, limit=4
    $region2: #{tpu_custom_call.1} parent=1 // loop_pre_header
      _
    $region3: #{tpu_custom_call.1} parent=1 // loop_header
      %s19 = sphi 0, %s23
      %p20 = scmp.ge.s32.totalorder %s19, 4
      %s29 = sphi 0, %s31
      %s32 = sphi 0, %s29
      %s33 = sphi 0, %s32
      %s49 = sphi 0, %s33
      %s53 = sphi 0, %s53
      %s55 = sphi 0, %s53
      %s56 = sphi 0, %s55
      %s70 = sphi 0, %s56
      %s74 = sphi 0, %s74
      %s76 = sphi 0, %s74
      %s77 = sphi 0, %s76
      %s91 = sphi 0, %s77
      %s95 = sphi 0, %s95
      %s97 = sphi 0, %s95
      %s98 = sphi 0, %s97
      %s112 = sphi 0, %s98
      %s116 = sphi 0, %s116
      %s118 = sphi 0, %s116
      %s119 = sphi 0, %s118
      %s133 = sphi 0, %s119
      %s139 = sphi 0, %s141
      %s142 = sphi 0, %s139
      %s143 = sphi 0, %s142
      %s159 = sphi 0, %s143
    $region4: #{tpu_custom_call.1} parent=1 // loop_header_branch
      %22 = sbr.rel (%p20) target = $region8
    $region5: #{tpu_custom_call.1} parent=1 // loop_body
      %s24 = ssub.s32 %s19, 1
      %s25 = ssub.s32 %s19, 2
      %s26 = sadd.s32 %s19, 1
      %s27 = ssub.s32 %s19, %s26
      %p28 = scmp.eq.s32.totalorder %s27, 0
      %s30 = sadd.s32 %s29, 1
      %s31 = scalar_select %p28, %s29, %s30
      %p34 = pneg %p28
      %p35 = scmp.eq.s32.totalorder %s19, 1
      %p36 = por %p34, %p35
      %p37 = scmp.ne.s32.totalorder %s29, %s32
      %p38 = scmp.eq.s32.totalorder %s19, 0
      %p39 = por %p37, %p38
      %p40 = scmp.ne.s32.totalorder %s29, %s32
      %p41 = scmp.eq.s32.totalorder %s24, 1
      %p42 = por %p40, %p41
      %p43 = scmp.ne.s32.totalorder %s32, %s33
      %p44 = scmp.eq.s32.totalorder %s24, 0
      %p45 = por %p43, %p44
      %p46 = scmp.ne.s32.totalorder %s32, %s33
      %p47 = scmp.eq.s32.totalorder %s25, 1
      %p48 = por %p46, %p47
      %p50 = scmp.ne.s32.totalorder %s33, %s49
      %p51 = scmp.eq.s32.totalorder %s25, 0
      %p52 = por %p50, %p51
      %s54 = sadd.s32 %s53, 1
      %p57 = scmp.eq.s32.totalorder %s19, 1
      %p58 = scmp.ne.s32.totalorder %s53, %s55
      %p59 = scmp.eq.s32.totalorder %s19, 0
      %p60 = por %p58, %p59
      %p61 = scmp.ne.s32.totalorder %s53, %s55
      %p62 = scmp.eq.s32.totalorder %s24, 1
      %p63 = por %p61, %p62
      %p64 = scmp.ne.s32.totalorder %s55, %s56
      %p65 = scmp.eq.s32.totalorder %s24, 0
      %p66 = por %p64, %p65
      %p67 = scmp.ne.s32.totalorder %s55, %s56
      %p68 = scmp.eq.s32.totalorder %s25, 1
      %p69 = por %p67, %p68
      %p71 = scmp.ne.s32.totalorder %s56, %s70
      %p72 = scmp.eq.s32.totalorder %s25, 0
      %p73 = por %p71, %p72
      %s75 = sadd.s32 %s74, 1
      %p78 = scmp.eq.s32.totalorder %s19, 1
      %p79 = scmp.ne.s32.totalorder %s74, %s76
      %p80 = scmp.eq.s32.totalorder %s19, 0
      %p81 = por %p79, %p80
      %p82 = scmp.ne.s32.totalorder %s74, %s76
      %p83 = scmp.eq.s32.totalorder %s24, 1
      %p84 = por %p82, %p83
      %p85 = scmp.ne.s32.totalorder %s76, %s77
      %p86 = scmp.eq.s32.totalorder %s24, 0
      %p87 = por %p85, %p86
      %p88 = scmp.ne.s32.totalorder %s76, %s77
      %p89 = scmp.eq.s32.totalorder %s25, 1
      %p90 = por %p88, %p89
      %p92 = scmp.ne.s32.totalorder %s77, %s91
      %p93 = scmp.eq.s32.totalorder %s25, 0
      %p94 = por %p92, %p93
      %s96 = sadd.s32 %s95, 1
      %p99 = scmp.eq.s32.totalorder %s19, 1
      %p100 = scmp.ne.s32.totalorder %s95, %s97
      %p101 = scmp.eq.s32.totalorder %s19, 0
      %p102 = por %p100, %p101
      %p103 = scmp.ne.s32.totalorder %s95, %s97
      %p104 = scmp.eq.s32.totalorder %s24, 1
      %p105 = por %p103, %p104
      %p106 = scmp.ne.s32.totalorder %s97, %s98
      %p107 = scmp.eq.s32.totalorder %s24, 0
      %p108 = por %p106, %p107
      %p109 = scmp.ne.s32.totalorder %s97, %s98
      %p110 = scmp.eq.s32.totalorder %s25, 1
      %p111 = por %p109, %p110
      %p113 = scmp.ne.s32.totalorder %s98, %s112
      %p114 = scmp.eq.s32.totalorder %s25, 0
      %p115 = por %p113, %p114
      %s117 = sadd.s32 %s116, 1
      %p120 = scmp.eq.s32.totalorder %s19, 1
      %p121 = scmp.ne.s32.totalorder %s116, %s118
      %p122 = scmp.eq.s32.totalorder %s19, 0
      %p123 = por %p121, %p122
      %p124 = scmp.ne.s32.totalorder %s116, %s118
      %p125 = scmp.eq.s32.totalorder %s24, 1
      %p126 = por %p124, %p125
      %p127 = scmp.ne.s32.totalorder %s118, %s119
      %p128 = scmp.eq.s32.totalorder %s24, 0
      %p129 = por %p127, %p128
      %p130 = scmp.ne.s32.totalorder %s118, %s119
      %p131 = scmp.eq.s32.totalorder %s25, 1
      %p132 = por %p130, %p131
      %p134 = scmp.ne.s32.totalorder %s119, %s133
      %p135 = scmp.eq.s32.totalorder %s25, 0
      %p136 = por %p134, %p135
      %s137 = ssub.s32 %s19, %s26
      %p138 = scmp.eq.s32.totalorder %s137, 0
      %s140 = sadd.s32 %s139, 1
      %s141 = scalar_select %p138, %s139, %s140
      %p144 = pneg %p138
      %p145 = scmp.eq.s32.totalorder %s19, 1
      %p146 = por %p144, %p145
      %p147 = scmp.ne.s32.totalorder %s139, %s142
      %p148 = scmp.eq.s32.totalorder %s19, 0
      %p149 = por %p147, %p148
      %p150 = scmp.ne.s32.totalorder %s139, %s142
      %p151 = scmp.eq.s32.totalorder %s24, 1
      %p152 = por %p150, %p151
      %p153 = scmp.ne.s32.totalorder %s142, %s143
      %p154 = scmp.eq.s32.totalorder %s24, 0
      %p155 = por %p153, %p154
      %p156 = scmp.ne.s32.totalorder %s142, %s143
      %p157 = scmp.eq.s32.totalorder %s25, 1
      %p158 = por %p156, %p157
      %p160 = scmp.ne.s32.totalorder %s143, %s159
      %p161 = scmp.eq.s32.totalorder %s25, 0
      %p162 = por %p160, %p161
      %p163 = scmp.le.s32.totalorder 1, %s19
      %p164 = scmp.lt.s32.totalorder %s19, 3
      %p165 = pnand %p163, %p164
      %p166 = pneg %p165
      // Predicated region
      $region9: #{tpu_custom_call.1} parent=5 // pred_check
        _
      $region10: #{tpu_custom_call.1} parent=5 // pred_check_branch
        %168 = sbr.rel (%p165) target = $region12
      $region11: #{tpu_custom_call.1} parent=5 // pred_region
        %s169 = ssub.s32 %s19, 1
        // Predicated region
        $region13: #{tpu_custom_call.1} parent=11 // pred_check
          %p170 = pneg %p66
        $region14: #{tpu_custom_call.1} parent=11 // pred_check_branch
          %172 = sbr.rel (%p170) target = $region16
        $region15: #{tpu_custom_call.1} parent=11 // pred_region
          %174 = vsyncadd [#allocation6], 0
          %s175 = sshll.u32 %s1, 4
          %s176 = int_to_ptr.hbm [resolvable:$true] %s175
          %s177 = sshll.u32 [#allocation5], 4
          %s178 = int_to_ptr.vmem [resolvable:$true] %s177
          %183 = dma.hbm_to_vmem [thread:$0]  %s176, 3072, %s178, [#allocation6], 192, 192, 12
        $region16: #{tpu_custom_call.1} parent=11 // pred_fallthru
          _
        // Predicated region
        $region17: #{tpu_custom_call.1} parent=11 // pred_check
          %p184 = pneg %p87
        $region18: #{tpu_custom_call.1} parent=11 // pred_check_branch
          %186 = sbr.rel (%p184) target = $region20
        $region19: #{tpu_custom_call.1} parent=11 // pred_region
          %188 = vsyncadd [#allocation6], 0
          %s190 = sshll.u32 %s2, 4
          %s191 = int_to_ptr.hbm [resolvable:$true] %s190
          %s192 = sshll.u32 [#allocation7], 4
          %s193 = int_to_ptr.vmem [resolvable:$true] %s192
          %195 = dma.hbm_to_vmem [thread:$0]  %s191, 48, %s193, [#allocation6]
        $region20: #{tpu_custom_call.1} parent=11 // pred_fallthru
          _
        // Predicated region
        $region21: #{tpu_custom_call.1} parent=11 // pred_check
          %p196 = pneg %p108
        $region22: #{tpu_custom_call.1} parent=11 // pred_check_branch
          %198 = sbr.rel (%p196) target = $region24
        $region23: #{tpu_custom_call.1} parent=11 // pred_region
          %200 = vsyncadd [#allocation9], 0
          %s201 = sshll.u32 %s3, 4
          %s202 = int_to_ptr.hbm [resolvable:$true] %s201
          %s203 = sshll.u32 [#allocation8], 4
          %s204 = int_to_ptr.vmem [resolvable:$true] %s203
          %209 = dma.hbm_to_vmem [thread:$0]  %s202, 1024, %s204, [#allocation9], 64, 64, 4
        $region24: #{tpu_custom_call.1} parent=11 // pred_fallthru
          _
        // Predicated region
        $region25: #{tpu_custom_call.1} parent=11 // pred_check
          %p210 = pneg %p129
        $region26: #{tpu_custom_call.1} parent=11 // pred_check_branch
          %212 = sbr.rel (%p210) target = $region28
        $region27: #{tpu_custom_call.1} parent=11 // pred_region
          _
        $region28: #{tpu_custom_call.1} parent=11 // pred_fallthru
          _
      $region12: #{tpu_custom_call.1} parent=5 // pred_fallthru
        _
      %p213 = scmp.lt.s32.totalorder %s19, 2
      // Predicated region
      $region29: #{tpu_custom_call.1} parent=5 // pred_check
        %p214 = pneg %p213
      $region30: #{tpu_custom_call.1} parent=5 // pred_check_branch
        %216 = sbr.rel (%p214) target = $region32
      $region31: #{tpu_custom_call.1} parent=5 // pred_region
        // Predicated region
        $region33: #{tpu_custom_call.1} parent=31 // pred_check
          %p217 = pneg %p39
        $region34: #{tpu_custom_call.1} parent=31 // pred_check_branch
          %219 = sbr.rel (%p217) target = $region36
        $region35: #{tpu_custom_call.1} parent=31 // pred_region
          %s220 = sand.u32 %s29, 1
          %s221 = scalar_lea.sflag [#allocation3], %s220
          %s222 = sand.u32 %s29, 1
          %s223 = smul.addr %s222, 8
          %s224 = scalar_lea.vmem [#allocation2], %s223
          %226 = vsyncadd %s221, 0
          %s227 = smul.addr %s19, 8
          %s228 = scalar_lea.hbm %s0, %s227
          %s230 = sshll.u32 %s228, 4
          %s231 = int_to_ptr.hbm [resolvable:$true] %s230
          %s232 = sshll.u32 %s224, 4
          %s233 = int_to_ptr.vmem [resolvable:$true] %s232
          %235 = dma.hbm_to_vmem [thread:$0]  %s231, 128, %s233, %s221
        $region36: #{tpu_custom_call.1} parent=31 // pred_fallthru
          _
      $region32: #{tpu_custom_call.1} parent=5 // pred_fallthru
        _
      %p236 = scmp.le.s32.totalorder 1, %s19
      %p237 = scmp.lt.s32.totalorder %s19, 3
      %p238 = pnand %p236, %p237
      %p239 = pneg %p238
      // Predicated region
      $region37: #{tpu_custom_call.1} parent=5 // pred_check
        _
      $region38: #{tpu_custom_call.1} parent=5 // pred_check_branch
        %241 = sbr.rel (%p238) target = $region40
      $region39: #{tpu_custom_call.1} parent=5 // pred_region
        %s242 = ssub.s32 %s19, 1
        %s243 = sand.u32 %s32, 1
        %s244 = scalar_lea.sflag [#allocation3], %s243
        %s245 = sand.u32 %s32, 1
        %s246 = smul.addr %s245, 8
        %s247 = scalar_lea.vmem [#allocation2], %s246
        // Predicated region
        $region41: #{tpu_custom_call.1} parent=39 // pred_check
          %p248 = pneg %p45
        $region42: #{tpu_custom_call.1} parent=39 // pred_check_branch
          %250 = sbr.rel (%p248) target = $region44
        $region43: #{tpu_custom_call.1} parent=39 // pred_region
          %252 = dma.done %s244, 128
        $region44: #{tpu_custom_call.1} parent=39 // pred_fallthru
          _
        // Predicated region
        $region45: #{tpu_custom_call.1} parent=39 // pred_check
          %p253 = pneg %p66
        $region46: #{tpu_custom_call.1} parent=39 // pred_check_branch
          %255 = sbr.rel (%p253) target = $region48
        $region47: #{tpu_custom_call.1} parent=39 // pred_region
          %257 = dma.done [#allocation6], 3072
        $region48: #{tpu_custom_call.1} parent=39 // pred_fallthru
          _
        // Predicated region
        $region49: #{tpu_custom_call.1} parent=39 // pred_check
          %p258 = pneg %p87
        $region50: #{tpu_custom_call.1} parent=39 // pred_check_branch
          %260 = sbr.rel (%p258) target = $region52
        $region51: #{tpu_custom_call.1} parent=39 // pred_region
          %262 = dma.done [#allocation6], 48
        $region52: #{tpu_custom_call.1} parent=39 // pred_fallthru
          _
        // Predicated region
        $region53: #{tpu_custom_call.1} parent=39 // pred_check
          %p263 = pneg %p108
        $region54: #{tpu_custom_call.1} parent=39 // pred_check_branch
          %265 = sbr.rel (%p263) target = $region56
        $region55: #{tpu_custom_call.1} parent=39 // pred_region
          %267 = dma.done [#allocation9], 1024
        $region56: #{tpu_custom_call.1} parent=39 // pred_fallthru
          _
        %s268 = sand.u32 %s32, 1
        %s269 = scalar_lea.sflag [#allocation3], %s268
        %s270 = sand.u32 %s32, 1
        %s271 = smul.addr %s270, 8
        %s272 = scalar_lea.vmem [#allocation2], %s271
        %p273 = pneg %p45
        %p274 = pneg %p42
        %p275 = pneg %p66
        %p276 = pneg %p63
        %p277 = pneg %p87
        %p278 = pneg %p84
        %p279 = pneg %p108
        %p280 = pneg %p105
        %p281 = pneg %p129
        %p282 = pneg %p126
        %p283 = pneg %p155
        %p284 = pneg %p152
        %s285 = sand.u32 %s142, 1
        %s286 = scalar_lea.sflag [#allocation4], %s285
        %s287 = sand.u32 %s142, 1
        %s288 = smul.addr %s287, 8
        %s289 = scalar_lea.vmem [#allocation10], %s288
        %v291 = vld [vmem:[%s247] sm:$0xff]
        %v292 = vpack.c.bf16 %v291, %v291
        %v293 = vld [vmem:[#allocation5] sm:$0xff]
        %v294 = vld [vmem:[#allocation5 + $0x8] sm:$0xf]
        %v295 = vld [vmem:[#allocation5 + $0xc] sm:$0xff]
        %v296 = vld [vmem:[#allocation5 + $0x14] sm:$0xf]
        %v297 = vld [vmem:[#allocation5 + $0x18] sm:$0xff]
        %v298 = vld [vmem:[#allocation5 + $0x20] sm:$0xf]
        %v299 = vld [vmem:[#allocation5 + $0x24] sm:$0xff]
        %v300 = vld [vmem:[#allocation5 + $0x2c] sm:$0xf]
        %v301 = vld [vmem:[#allocation5 + $0x30] sm:$0xff]
        %v302 = vld [vmem:[#allocation5 + $0x38] sm:$0xf]
        %v303 = vld [vmem:[#allocation5 + $0x3c] sm:$0xff]
        %v304 = vld [vmem:[#allocation5 + $0x44] sm:$0xf]
        %v305 = vld [vmem:[#allocation5 + $0x48] sm:$0xff]
        %v306 = vld [vmem:[#allocation5 + $0x50] sm:$0xf]
        %v307 = vld [vmem:[#allocation5 + $0x54] sm:$0xff]
        %v308 = vld [vmem:[#allocation5 + $0x5c] sm:$0xf]
        %v309 = vld [vmem:[#allocation5 + $0x60] sm:$0xff]
        %v310 = vld [vmem:[#allocation5 + $0x68] sm:$0xf]
        %v311 = vld [vmem:[#allocation5 + $0x6c] sm:$0xff]
        %v312 = vld [vmem:[#allocation5 + $0x74] sm:$0xf]
        %v313 = vld [vmem:[#allocation5 + $0x78] sm:$0xff]
        %v314 = vld [vmem:[#allocation5 + $0x80] sm:$0xf]
        %v315 = vld [vmem:[#allocation5 + $0x84] sm:$0xff]
        %v316 = vld [vmem:[#allocation5 + $0x8c] sm:$0xf]
        %v317 = vld [vmem:[#allocation5 + $0x90] sm:$0xff]
        %v318 = vld [vmem:[#allocation5 + $0x98] sm:$0xf]
        %v319 = vld [vmem:[#allocation5 + $0x9c] sm:$0xff]
        %v320 = vld [vmem:[#allocation5 + $0xa4] sm:$0xf]
        %v321 = vld [vmem:[#allocation5 + $0xa8] sm:$0xff]
        %v322 = vld [vmem:[#allocation5 + $0xb0] sm:$0xf]
        %v323 = vld [vmem:[#allocation5 + $0xb4] sm:$0xff]
        %v324 = vld [vmem:[#allocation5 + $0xbc] sm:$0xf]
        %v325 = vld [vmem:[#allocation7] sm:$0x7]
        %v327 = vperm.slane %v325, 0
        %v328 = vperm.slane %v325, 1
        %v329 = vperm.slane %v325, 2
        %v365 = vunpack.c.l.b16 %v293
        %v366 = vunpack.c.h.b16 %v293
        %v367 = vunpack.c.l.b16 %v294
        %v368 = vunpack.c.l.b16 %v295
        %v369 = vunpack.c.h.b16 %v295
        %v370 = vunpack.c.l.b16 %v296
        %v371 = vunpack.c.l.b16 %v297
        %v372 = vunpack.c.h.b16 %v297
        %v373 = vunpack.c.l.b16 %v298
        %v374 = vunpack.c.l.b16 %v299
        %v375 = vunpack.c.h.b16 %v299
        %v376 = vunpack.c.l.b16 %v300
        %v377 = vunpack.c.l.b16 %v301
        %v378 = vunpack.c.h.b16 %v301
        %v379 = vunpack.c.l.b16 %v302
        %v380 = vunpack.c.l.b16 %v303
        %v381 = vunpack.c.h.b16 %v303
        %v382 = vunpack.c.l.b16 %v304
        %v383 = vunpack.c.l.b16 %v305
        %v384 = vunpack.c.h.b16 %v305
        %v385 = vunpack.c.l.b16 %v306
        %v386 = vunpack.c.l.b16 %v307
        %v387 = vunpack.c.h.b16 %v307
        %v388 = vunpack.c.l.b16 %v308
        %v389 = vunpack.c.l.b16 %v309
        %v390 = vunpack.c.h.b16 %v309
        %v391 = vunpack.c.l.b16 %v310
        %v392 = vunpack.c.l.b16 %v311
        %v393 = vunpack.c.h.b16 %v311
        %v394 = vunpack.c.l.b16 %v312
        %v395 = vunpack.c.l.b16 %v313
        %v396 = vunpack.c.h.b16 %v313
        %v397 = vunpack.c.l.b16 %v314
        %v398 = vunpack.c.l.b16 %v315
        %v399 = vunpack.c.h.b16 %v315
        %v400 = vunpack.c.l.b16 %v316
        %v401 = vunpack.c.l.b16 %v317
        %v402 = vunpack.c.h.b16 %v317
        %v403 = vunpack.c.l.b16 %v318
        %v404 = vunpack.c.l.b16 %v319
        %v405 = vunpack.c.h.b16 %v319
        %v406 = vunpack.c.l.b16 %v320
        %v407 = vunpack.c.l.b16 %v321
        %v408 = vunpack.c.h.b16 %v321
        %v409 = vunpack.c.l.b16 %v322
        %v410 = vunpack.c.l.b16 %v323
        %v411 = vunpack.c.h.b16 %v323
        %v412 = vunpack.c.l.b16 %v324
        %v413 = vpack.c.b16 %v368, %v365
        %v414 = vpack.c.b16 %v369, %v366
        %v415 = vpack.c.b16 %v370, %v367
        %v416 = vpack.c.b16 %v374, %v371
        %v417 = vpack.c.b16 %v375, %v372
        %v418 = vpack.c.b16 %v376, %v373
        %v419 = vpack.c.b16 %v380, %v377
        %v420 = vpack.c.b16 %v381, %v378
        %v421 = vpack.c.b16 %v382, %v379
        %v422 = vpack.c.b16 %v386, %v383
        %v423 = vpack.c.b16 %v387, %v384
        %v424 = vpack.c.b16 %v388, %v385
        %v425 = vpack.c.b16 %v392, %v389
        %v426 = vpack.c.b16 %v393, %v390
        %v427 = vpack.c.b16 %v394, %v391
        %v428 = vpack.c.b16 %v398, %v395
        %v429 = vpack.c.b16 %v399, %v396
        %v430 = vpack.c.b16 %v400, %v397
        %v431 = vpack.c.b16 %v404, %v401
        %v432 = vpack.c.b16 %v405, %v402
        %v433 = vpack.c.b16 %v406, %v403
        %v434 = vpack.c.b16 %v410, %v407
        %v435 = vpack.c.b16 %v411, %v408
        %v436 = vpack.c.b16 %v412, %v409
        %461 = vmatpush.bf16.msra.mxu0 %v434
        %462 = vmatpush.bf16.msra.mxu0 %v431
        %463 = vmatpush.bf16.msra.mxu0 %v428
        %464 = vmatpush.bf16.msra.mxu0 %v425
        %465 = vmatpush.bf16.msra.mxu0 %v422
        %466 = vmatpush.bf16.msra.mxu0 %v419
        %467 = vmatpush.bf16.msra.mxu0 %v416
        %468 = vmatpush.bf16.msra.mxu0 %v413
        %469 = vmatmul.bf16.gmra.mxu0 %v292
        %v470 = vpop.f32.mrf.mxu0
        %v471 = vadd.f32 %v327, %v470
        %v472 = vpop.f32.mrf.mxu0
        %473 = vdwg.mxu0
        %474 = vmatpush.bf16.msra.mxu0 %v435
        %475 = vmatpush.bf16.msra.mxu0 %v432
        %476 = vmatpush.bf16.msra.mxu0 %v429
        %477 = vmatpush.bf16.msra.mxu0 %v426
        %478 = vmatpush.bf16.msra.mxu0 %v423
        %479 = vmatpush.bf16.msra.mxu0 %v420
        %480 = vmatpush.bf16.msra.mxu0 %v417
        %481 = vmatpush.bf16.msra.mxu0 %v414
        %482 = vmatmul.bf16.gmra.mxu0 %v292
        %v483 = vpop.f32.mrf.mxu0
        %v484 = vadd.f32 %v328, %v483
        %v485 = vpop.f32.mrf.mxu0
        %486 = vdwg.mxu0
        %487 = vmatpush.bf16.msra.mxu0 %v436
        %488 = vmatpush.bf16.msra.mxu0 %v433
        %489 = vmatpush.bf16.msra.mxu0 %v430
        %490 = vmatpush.bf16.msra.mxu0 %v427
        %491 = vmatpush.bf16.msra.mxu0 %v424
        %492 = vmatpush.bf16.msra.mxu0 %v421
        %493 = vmatpush.bf16.msra.mxu0 %v418
        %494 = vmatpush.bf16.msra.mxu0 %v415
        %495 = vmatmul.bf16.gmra.mxu0 %v292
        %v496 = vpop.f32.mrf.mxu0
        %v497 = vadd.f32 %v329, %v496
        %v498 = vpop.f32.mrf.mxu0
        %499 = vdwg.mxu0
        %v500 = vpack.c.bf16 %v471, %v471
        %v501 = vpack.c.bf16 %v484, %v484
        %v502 = vpack.c.bf16 %v497, %v497
        %v503 = vld [vmem:[%s4] sm:$0x1]
        %v505 = vperm.slane %v503, 0
        %vm507 = vcmask 261120
        %v509 = vsel %vm507, %v500, 0
        %v512 = vsel %vm507, %v501, 0
        %514 = vmatpush.bf16.xpose.msra.mxu0 0
        %515 = vmatpush.bf16.xpose.msra.mxu0 0
        %516 = vmatpush.bf16.xpose.msra.mxu0 0
        %517 = vmatpush.bf16.xpose.msra.mxu0 0
        %518 = vmatpush.bf16.xpose.msra.mxu0 0
        %519 = vmatpush.bf16.xpose.msra.mxu0 0
        %520 = vmatpush.bf16.xpose.msra.mxu0 0
        %521 = vmatpush.bf16.xpose.msra.mxu0 %v512
        %522 = vmatmul.bf16.gmra.mxu0 %v509
        %v523 = vpop.f32.mrf.mxu0
        %v524 = vadd.f32 0.0, %v523
        %v525 = vpop.f32.mrf.mxu0
        %526 = vdwg.mxu0
        %vm527 = vcmask 64512
        %v528 = vsel %vm527, %v524, -inf
        %529 = vmax.xlane.f32.xlu0 %v528
        %v530 = vpop.xlane.xlu0 %529
        %v531 = vsub.f32 %v524, %v530
        %v532 = vmul.f32 %v531, 1.442695
        %v533 = vpow.pop %v532
        %v534 = vsel %vm527, %v533, 0.0
        %535 = vadd.xlane.f32.xlu0 %v534
        %v536 = vpop.xlane.xlu0 %535
        %v537 = vrcp.pop %v536
        %v538 = vmul.f32 %v533, %v537
        %v539 = vpack.c.bf16 %v538, %v538
        %v541 = vsel %vm527, %v539, 0
        %vm543 = vcmask 1043456
        %v545 = vsel %vm543, %v502, 0
        %547 = vmatpush.bf16.msra.mxu0 0
        %548 = vmatpush.bf16.msra.mxu0 0
        %549 = vmatpush.bf16.msra.mxu0 0
        %550 = vmatpush.bf16.msra.mxu0 0
        %551 = vmatpush.bf16.msra.mxu0 0
        %552 = vmatpush.bf16.msra.mxu0 0
        %553 = vmatpush.bf16.msra.mxu0 0
        %554 = vmatpush.bf16.msra.mxu0 %v545
        %555 = vmatmul.bf16.gmra.mxu0 %v541
        %v556 = vpop.f32.mrf.mxu0
        %v557 = vadd.f32 0.0, %v556
        %v558 = vpop.f32.mrf.mxu0
        %559 = vdwg.mxu0
        %v560 = vpack.c.bf16 %v557, %v557
        %v561 = vld [vmem:[#allocation8] sm:$0xf]
        %v562 = vld [vmem:[#allocation8 + $0x4] sm:$0xf]
        %v563 = vld [vmem:[#allocation8 + $0x8] sm:$0xf]
        %v564 = vld [vmem:[#allocation8 + $0xc] sm:$0xf]
        %v569 = vunpack.c.l.b16 %v561
        %v570 = vunpack.c.l.b16 %v562
        %v571 = vunpack.c.l.b16 %v563
        %v572 = vunpack.c.l.b16 %v564
        %v573 = vpack.c.b16 %v570, %v569
        %v574 = vpack.c.b16 %v572, %v571
        %v578 = vsel %vm507, %v560, 0
        %580 = vmatpush.bf16.msra.mxu0 0
        %581 = vmatpush.bf16.msra.mxu0 0
        %582 = vmatpush.bf16.msra.mxu0 0
        %583 = vmatpush.bf16.msra.mxu0 0
        %584 = vmatpush.bf16.msra.mxu0 0
        %585 = vmatpush.bf16.msra.mxu0 0
        %586 = vmatpush.bf16.msra.mxu0 %v574
        %587 = vmatpush.bf16.msra.mxu0 %v573
        %588 = vmatmul.bf16.gmra.mxu0 %v578
        %v589 = vpop.f32.mrf.mxu0
        %v590 = vadd.f32 0.0, %v589
        %v591 = vpop.f32.mrf.mxu0
        %592 = vdwg.mxu0
        %v593 = vadd.f32 %v505, %v590
        %v595 = vunpack.c.l.b16 %v500
        %v596 = vpack.c.b16 %v595, %v595
        %597 = vrot.lane.b32.xlu0 %v596, 96
        %v598 = vpop.permute.xlu0 %597
        %v600 = vunpack.c.l.b16 %v501
        %v601 = vpack.c.b16 %v600, %v600
        %602 = vrot.lane.b32.xlu0 %v601, 96
        %v603 = vpop.permute.xlu0 %602
        %v605 = vsel %vm507, %v598, 0
        %v608 = vsel %vm507, %v603, 0
        %610 = vmatpush.bf16.xpose.msra.mxu0 0
        %611 = vmatpush.bf16.xpose.msra.mxu0 0
        %612 = vmatpush.bf16.xpose.msra.mxu0 0
        %613 = vmatpush.bf16.xpose.msra.mxu0 0
        %614 = vmatpush.bf16.xpose.msra.mxu0 0
        %615 = vmatpush.bf16.xpose.msra.mxu0 0
        %616 = vmatpush.bf16.xpose.msra.mxu0 0
        %617 = vmatpush.bf16.xpose.msra.mxu0 %v608
        %618 = vmatmul.bf16.gmra.mxu0 %v605
        %v619 = vpop.f32.mrf.mxu0
        %v620 = vadd.f32 0.0, %v619
        %v621 = vpop.f32.mrf.mxu0
        %622 = vdwg.mxu0
        %v623 = vsel %vm527, %v620, -inf
        %624 = vmax.xlane.f32.xlu0 %v623
        %v625 = vpop.xlane.xlu0 %624
        %v626 = vsub.f32 %v620, %v625
        %v627 = vmul.f32 %v626, 1.442695
        %v628 = vpow.pop %v627
        %v629 = vsel %vm527, %v628, 0.0
        %630 = vadd.xlane.f32.xlu0 %v629
        %v631 = vpop.xlane.xlu0 %630
        %v632 = vrcp.pop %v631
        %v633 = vmul.f32 %v628, %v632
        %v634 = vpack.c.bf16 %v633, %v633
        %v636 = vunpack.c.l.b16 %v502
        %v637 = vpack.c.b16 %v636, %v636
        %638 = vrot.lane.b32.xlu0 %v637, 96
        %v639 = vpop.permute.xlu0 %638
        %v641 = vsel %vm527, %v634, 0
        %v644 = vsel %vm543, %v639, 0
        %646 = vmatpush.bf16.msra.mxu0 0
        %647 = vmatpush.bf16.msra.mxu0 0
        %648 = vmatpush.bf16.msra.mxu0 0
        %649 = vmatpush.bf16.msra.mxu0 0
        %650 = vmatpush.bf16.msra.mxu0 0
        %651 = vmatpush.bf16.msra.mxu0 0
        %652 = vmatpush.bf16.msra.mxu0 0
        %653 = vmatpush.bf16.msra.mxu0 %v644
        %654 = vmatmul.bf16.gmra.mxu0 %v641
        %v655 = vpop.f32.mrf.mxu0
        %v656 = vadd.f32 0.0, %v655
        %v657 = vpop.f32.mrf.mxu0
        %658 = vdwg.mxu0
        %v659 = vpack.c.bf16 %v656, %v656
        %s660 = scalar_lea.vmem [#allocation8], 16
        %v661 = vld [vmem:[%s660] sm:$0xf]
        %v662 = vld [vmem:[%s660 + $0x4] sm:$0xf]
        %v663 = vld [vmem:[%s660 + $0x8] sm:$0xf]
        %v664 = vld [vmem:[%s660 + $0xc] sm:$0xf]
        %v669 = vunpack.c.l.b16 %v661
        %v670 = vunpack.c.l.b16 %v662
        %v671 = vunpack.c.l.b16 %v663
        %v672 = vunpack.c.l.b16 %v664
        %v673 = vpack.c.b16 %v670, %v669
        %v674 = vpack.c.b16 %v672, %v671
        %v678 = vsel %vm507, %v659, 0
        %680 = vmatpush.bf16.msra.mxu0 0
        %681 = vmatpush.bf16.msra.mxu0 0
        %682 = vmatpush.bf16.msra.mxu0 0
        %683 = vmatpush.bf16.msra.mxu0 0
        %684 = vmatpush.bf16.msra.mxu0 0
        %685 = vmatpush.bf16.msra.mxu0 0
        %686 = vmatpush.bf16.msra.mxu0 %v674
        %687 = vmatpush.bf16.msra.mxu0 %v673
        %688 = vmatmul.bf16.gmra.mxu0 %v678
        %v689 = vpop.f32.mrf.mxu0
        %v690 = vadd.f32 0.0, %v689
        %v691 = vpop.f32.mrf.mxu0
        %692 = vdwg.mxu0
        %v693 = vadd.f32 %v593, %v690
        %694 = vrot.lane.b32.xlu0 %v596, 64
        %v695 = vpop.permute.xlu0 %694
        %696 = vrot.lane.b32.xlu0 %v601, 64
        %v697 = vpop.permute.xlu0 %696
        %v699 = vsel %vm507, %v695, 0
        %v702 = vsel %vm507, %v697, 0
        %704 = vmatpush.bf16.xpose.msra.mxu0 0
        %705 = vmatpush.bf16.xpose.msra.mxu0 0
        %706 = vmatpush.bf16.xpose.msra.mxu0 0
        %707 = vmatpush.bf16.xpose.msra.mxu0 0
        %708 = vmatpush.bf16.xpose.msra.mxu0 0
        %709 = vmatpush.bf16.xpose.msra.mxu0 0
        %710 = vmatpush.bf16.xpose.msra.mxu0 0
        %711 = vmatpush.bf16.xpose.msra.mxu0 %v702
        %712 = vmatmul.bf16.gmra.mxu0 %v699
        %v713 = vpop.f32.mrf.mxu0
        %v714 = vadd.f32 0.0, %v713
        %v715 = vpop.f32.mrf.mxu0
        %716 = vdwg.mxu0
        %v717 = vsel %vm527, %v714, -inf
        %718 = vmax.xlane.f32.xlu0 %v717
        %v719 = vpop.xlane.xlu0 %718
        %v720 = vsub.f32 %v714, %v719
        %v721 = vmul.f32 %v720, 1.442695
        %v722 = vpow.pop %v721
        %v723 = vsel %vm527, %v722, 0.0
        %724 = vadd.xlane.f32.xlu0 %v723
        %v725 = vpop.xlane.xlu0 %724
        %v726 = vrcp.pop %v725
        %v727 = vmul.f32 %v722, %v726
        %v728 = vpack.c.bf16 %v727, %v727
        %729 = vrot.lane.b32.xlu0 %v637, 64
        %v730 = vpop.permute.xlu0 %729
        %v732 = vsel %vm527, %v728, 0
        %v735 = vsel %vm543, %v730, 0
        %737 = vmatpush.bf16.msra.mxu0 0
        %738 = vmatpush.bf16.msra.mxu0 0
        %739 = vmatpush.bf16.msra.mxu0 0
        %740 = vmatpush.bf16.msra.mxu0 0
        %741 = vmatpush.bf16.msra.mxu0 0
        %742 = vmatpush.bf16.msra.mxu0 0
        %743 = vmatpush.bf16.msra.mxu0 0
        %744 = vmatpush.bf16.msra.mxu0 %v735
        %745 = vmatmul.bf16.gmra.mxu0 %v732
        %v746 = vpop.f32.mrf.mxu0
        %v747 = vadd.f32 0.0, %v746
        %v748 = vpop.f32.mrf.mxu0
        %749 = vdwg.mxu0
        %v750 = vpack.c.bf16 %v747, %v747
        %s751 = scalar_lea.vmem [#allocation8], 32
        %v752 = vld [vmem:[%s751] sm:$0xf]
        %v753 = vld [vmem:[%s751 + $0x4] sm:$0xf]
        %v754 = vld [vmem:[%s751 + $0x8] sm:$0xf]
        %v755 = vld [vmem:[%s751 + $0xc] sm:$0xf]
        %v760 = vunpack.c.l.b16 %v752
        %v761 = vunpack.c.l.b16 %v753
        %v762 = vunpack.c.l.b16 %v754
        %v763 = vunpack.c.l.b16 %v755
        %v764 = vpack.c.b16 %v761, %v760
        %v765 = vpack.c.b16 %v763, %v762
        %v769 = vsel %vm507, %v750, 0
        %771 = vmatpush.bf16.msra.mxu0 0
        %772 = vmatpush.bf16.msra.mxu0 0
        %773 = vmatpush.bf16.msra.mxu0 0
        %774 = vmatpush.bf16.msra.mxu0 0
        %775 = vmatpush.bf16.msra.mxu0 0
        %776 = vmatpush.bf16.msra.mxu0 0
        %777 = vmatpush.bf16.msra.mxu0 %v765
        %778 = vmatpush.bf16.msra.mxu0 %v764
        %779 = vmatmul.bf16.gmra.mxu0 %v769
        %v780 = vpop.f32.mrf.mxu0
        %v781 = vadd.f32 0.0, %v780
        %v782 = vpop.f32.mrf.mxu0
        %783 = vdwg.mxu0
        %v784 = vadd.f32 %v693, %v781
        %785 = vrot.lane.b32.xlu0 %v596, 32
        %v786 = vpop.permute.xlu0 %785
        %787 = vrot.lane.b32.xlu0 %v601, 32
        %v788 = vpop.permute.xlu0 %787
        %v790 = vsel %vm507, %v786, 0
        %v793 = vsel %vm507, %v788, 0
        %795 = vmatpush.bf16.xpose.msra.mxu0 0
        %796 = vmatpush.bf16.xpose.msra.mxu0 0
        %797 = vmatpush.bf16.xpose.msra.mxu0 0
        %798 = vmatpush.bf16.xpose.msra.mxu0 0
        %799 = vmatpush.bf16.xpose.msra.mxu0 0
        %800 = vmatpush.bf16.xpose.msra.mxu0 0
        %801 = vmatpush.bf16.xpose.msra.mxu0 0
        %802 = vmatpush.bf16.xpose.msra.mxu0 %v793
        %803 = vmatmul.bf16.gmra.mxu0 %v790
        %v804 = vpop.f32.mrf.mxu0
        %v805 = vadd.f32 0.0, %v804
        %v806 = vpop.f32.mrf.mxu0
        %807 = vdwg.mxu0
        %v808 = vsel %vm527, %v805, -inf
        %809 = vmax.xlane.f32.xlu0 %v808
        %v810 = vpop.xlane.xlu0 %809
        %v811 = vsub.f32 %v805, %v810
        %v812 = vmul.f32 %v811, 1.442695
        %v813 = vpow.pop %v812
        %v814 = vsel %vm527, %v813, 0.0
        %815 = vadd.xlane.f32.xlu0 %v814
        %v816 = vpop.xlane.xlu0 %815
        %v817 = vrcp.pop %v816
        %v818 = vmul.f32 %v813, %v817
        %v819 = vpack.c.bf16 %v818, %v818
        %820 = vrot.lane.b32.xlu0 %v637, 32
        %v821 = vpop.permute.xlu0 %820
        %v823 = vsel %vm527, %v819, 0
        %v826 = vsel %vm543, %v821, 0
        %828 = vmatpush.bf16.msra.mxu0 0
        %829 = vmatpush.bf16.msra.mxu0 0
        %830 = vmatpush.bf16.msra.mxu0 0
        %831 = vmatpush.bf16.msra.mxu0 0
        %832 = vmatpush.bf16.msra.mxu0 0
        %833 = vmatpush.bf16.msra.mxu0 0
        %834 = vmatpush.bf16.msra.mxu0 0
        %835 = vmatpush.bf16.msra.mxu0 %v826
        %836 = vmatmul.bf16.gmra.mxu0 %v823
        %v837 = vpop.f32.mrf.mxu0
        %v838 = vadd.f32 0.0, %v837
        %v839 = vpop.f32.mrf.mxu0
        %840 = vdwg.mxu0
        %v841 = vpack.c.bf16 %v838, %v838
        %s842 = scalar_lea.vmem [#allocation8], 48
        %v843 = vld [vmem:[%s842] sm:$0xf]
        %v844 = vld [vmem:[%s842 + $0x4] sm:$0xf]
        %v845 = vld [vmem:[%s842 + $0x8] sm:$0xf]
        %v846 = vld [vmem:[%s842 + $0xc] sm:$0xf]
        %v851 = vunpack.c.l.b16 %v843
        %v852 = vunpack.c.l.b16 %v844
        %v853 = vunpack.c.l.b16 %v845
        %v854 = vunpack.c.l.b16 %v846
        %v855 = vpack.c.b16 %v852, %v851
        %v856 = vpack.c.b16 %v854, %v853
        %v860 = vsel %vm507, %v841, 0
        %862 = vmatpush.bf16.msra.mxu0 0
        %863 = vmatpush.bf16.msra.mxu0 0
        %864 = vmatpush.bf16.msra.mxu0 0
        %865 = vmatpush.bf16.msra.mxu0 0
        %866 = vmatpush.bf16.msra.mxu0 0
        %867 = vmatpush.bf16.msra.mxu0 0
        %868 = vmatpush.bf16.msra.mxu0 %v856
        %869 = vmatpush.bf16.msra.mxu0 %v855
        %870 = vmatmul.bf16.gmra.mxu0 %v860
        %v871 = vpop.f32.mrf.mxu0
        %v872 = vadd.f32 0.0, %v871
        %v873 = vpop.f32.mrf.mxu0
        %874 = vdwg.mxu0
        %v875 = vadd.f32 %v784, %v872
        %876 = vst [vmem:[%s289] sm:$0xff] %v875
        %s877 = sand.u32 %s142, 1
        %s878 = scalar_lea.sflag [#allocation4], %s877
        %s879 = sand.u32 %s142, 1
        %s880 = smul.addr %s879, 8
        %s881 = scalar_lea.vmem [#allocation10], %s880
        // Predicated region
        $region57: #{tpu_custom_call.1} parent=39 // pred_check
          %p882 = pneg %p152
        $region58: #{tpu_custom_call.1} parent=39 // pred_check_branch
          %884 = sbr.rel (%p882) target = $region60
        $region59: #{tpu_custom_call.1} parent=39 // pred_region
          %886 = vsyncadd %s878, 0
          %s887 = smul.addr %s24, 8
          %s888 = scalar_lea.hbm %s5, %s887
          %s890 = sshll.u32 %s881, 4
          %s891 = int_to_ptr.vmem [resolvable:$true] %s890
          %s892 = sshll.u32 %s888, 4
          %s893 = int_to_ptr.hbm [resolvable:$true] %s892
          %895 = dma.vmem_to_hbm [thread:$0]  %s891, 128, %s893, %s878
        $region60: #{tpu_custom_call.1} parent=39 // pred_fallthru
          _
      $region40: #{tpu_custom_call.1} parent=5 // pred_fallthru
        _
      %p896 = scmp.le.s32.totalorder 2, %s19
      // Predicated region
      $region61: #{tpu_custom_call.1} parent=5 // pred_check
        %p897 = pneg %p896
      $region62: #{tpu_custom_call.1} parent=5 // pred_check_branch
        %899 = sbr.rel (%p897) target = $region64
      $region63: #{tpu_custom_call.1} parent=5 // pred_region
        %s900 = ssub.s32 %s19, 2
        // Predicated region
        $region65: #{tpu_custom_call.1} parent=63 // pred_check
          %p901 = pneg %p158
        $region66: #{tpu_custom_call.1} parent=63 // pred_check_branch
          %903 = sbr.rel (%p901) target = $region68
        $region67: #{tpu_custom_call.1} parent=63 // pred_region
          %s904 = sand.u32 %s143, 1
          %s905 = scalar_lea.sflag [#allocation4], %s904
          %s906 = sand.u32 %s143, 1
          %s907 = smul.addr %s906, 8
          %s908 = scalar_lea.vmem [#allocation10], %s907
          %910 = dma.done %s905, 128
        $region68: #{tpu_custom_call.1} parent=63 // pred_fallthru
          _
      $region64: #{tpu_custom_call.1} parent=5 // pred_fallthru
        _
    $region6: #{tpu_custom_call.1} parent=1 // loop_footer
      %s23 = sadd.s32 1, %s19
    $region7: #{tpu_custom_call.1} parent=1 // loop_footer_branch
      %18 = sbr.rel target = $region3
    $region8: #{tpu_custom_call.1} parent=1 // loop_exit
      _
    %911 = vsyncpa [#allocation3], 1
    %s912 = scalar_lea.sflag [#allocation3], 1
    %913 = vsyncpa %s912, 1
    %914 = vsyncpa [#allocation6], 1
    %915 = vsyncpa [#allocation9], 1
    %916 = vsyncpa [#allocation4], 1
    %s917 = scalar_lea.sflag [#allocation4], 1
    %918 = vsyncpa %s917, 1

</llo_original>
